<compile_context>
chip_gen: v7x
topology: tpu7x:2x2x1
jax: 0.10.0
libtpu: 0.0.40
codegen_flags: <defaults>
</compile_context>

<pallas_src>
import jax
import jax.numpy as jnp
from jax.experimental import pallas as pl
from jax.experimental.pallas import tpu as pltpu

_LANES = 128
_SUBLANES = 8
_ROW_ALIGN = 64                 # multiple of 32 (dtype packing) and of 8*8 (tree sum)
_MAX_TILE_ROWS = 4096           # (4096,128) f32 block = 2 MiB; 2 inputs x 2 bufs = 8 MiB
_VMEM_LIMIT_BYTES = 48 * 1024 * 1024


def _num_tensorcores() -> int:
    """TensorCores behind one JAX device (megacore v4/v5p and v7x -> 2)."""
    try:
        kind = jax.devices()[0].device_kind.lower()
    except Exception:
        return 1
    return 2 if any(tag in kind for tag in ("v4", "v5p", "v7", "7x")) else 1


def _round_up(x: int, m: int) -> int:
    return -(-x // m) * m


def _make_kernel(true_rows, steps_per_core, tile_rows, needs_mask):
    r = tile_rows // _SUBLANES

    def _tile_sum(x):
        # (tile_rows, 128) -> (8, 128).  2-level tree keeps the dependent vadd
        # chain ~(8 + r/8) long instead of r (latency + f32 drift).
        if r % 8 == 0:
            x = x.reshape(r // 8, 8, _SUBLANES, _LANES)
            return x.sum(axis=1).sum(axis=0)
        return x.reshape(r, _SUBLANES, _LANES).sum(axis=0)

    def kernel(out_ref, y_ref, acc_ref):
        """Grid = (cores, steps).  acc_ref: (1, 3, 8, 128) f32 per-core partials.

        acc slot 0: sum of -(BCE term)  (negated once in the wrapper)
        acc slot 1: sum(out * y)        (dice intersection)
        acc slot 2: sum(out + y)        (dice denominator)
        """
        i = pl.program_id(1)

        @pl.when(i == 0)
        def _init():
            acc_ref[...] = jnp.zeros_like(acc_ref)

        o = out_ref[...].astype(jnp.float32)
        t = y_ref[...].astype(jnp.float32)

        if needs_mask:
            # Ragged / over-covered blocks: zero rows past the true extent
            # *before* any math so DMA garbage (possibly NaN) never propagates.
            g = pl.program_id(0) * steps_per_core + i
            row_start = g * tile_rows
            row_idx = jax.lax.broadcasted_iota(jnp.int32, (tile_rows, _LANES), 0)
            valid = row_idx < (true_rows - row_start)
            o = jnp.where(valid, o, 0.0)
            t = jnp.where(valid, t, 0.0)

        # nn.BCELoss clamps each log at -100.  FMA-friendly single-`t` form
        # (equal to t*log_o + (1-t)*log_1mo, soft labels included); the sign
        # flip is applied once to the final sum in the wrapper.
        log_o = jnp.maximum(jnp.log(o), -100.0)
        log_1mo = jnp.maximum(jnp.log(1.0 - o), -100.0)
        neg_bce = log_1mo + t * (log_o - log_1mo)

        acc_ref[0, 0, :, :] += _tile_sum(neg_bce)
        acc_ref[0, 1, :, :] += _tile_sum(o * t)
        acc_ref[0, 2, :, :] += _tile_sum(o + t)

    return kernel


def bce_with_dice_loss(out, y, alpha=1.0):
    """out, y: same shape (any rank / dtype); returns scalar float32 loss."""
    assert out.shape == y.shape
    n_elem = out.size
    smooth = 1e-09

    flat_o = jnp.reshape(out, (-1,))
    flat_y = jnp.reshape(y, (-1,))

    num_cores = _num_tensorcores()
    rows = -(-n_elem // _LANES)               # ceil(n / 128)
    if rows < num_cores * _ROW_ALIGN:
        num_cores = 1                         # tiny input: skip the core split

    per_core_rows = -(-rows // num_cores)
    tile_rows = min(_MAX_TILE_ROWS, _round_up(per_core_rows, _ROW_ALIGN))
    steps_per_core = -(-rows // (num_cores * tile_rows))
    coverage_rows = num_cores * steps_per_core * tile_rows

    rem = n_elem % _LANES
    if rem == 0:
        # Free reshape (pure bitcast) — no extra HBM copy of the inputs.
        out2d = flat_o.reshape(rows, _LANES)
        y2d = flat_y.reshape(rows, _LANES)
        needs_mask = coverage_rows != rows
        arr_rows = rows
    else:
        # TODO(synk): rare path (element count not a multiple of 128): jnp.pad
        # materializes one extra copy of each input.  Zero padding is exact
        # for all three sums (the -100 clamp makes the o=0,t=0 BCE term 0).
        pad = coverage_rows * _LANES - n_elem
        out2d = jnp.pad(flat_o, (0, pad)).reshape(coverage_rows, _LANES)
        y2d = jnp.pad(flat_y, (0, pad)).reshape(coverage_rows, _LANES)
        needs_mask = False
        arr_rows = coverage_rows

    last_block = -(-arr_rows // tile_rows) - 1

    def in_map(p, i):
        # Clamp so no block is ever fully out of bounds; over-covered steps
        # have a nominal row_start >= rows and are zeroed by the in-kernel mask.
        return (jnp.minimum(p * steps_per_core + i, last_block), 0)

    kernel = _make_kernel(rows, steps_per_core, tile_rows, needs_mask)

    partials = pl.pallas_call(
        kernel,
        out_shape=jax.ShapeDtypeStruct(
            (num_cores, 3, _SUBLANES, _LANES), jnp.float32
        ),
        grid_spec=pltpu.PrefetchScalarGridSpec(
            num_scalar_prefetch=0,
            grid=(num_cores, steps_per_core),
            in_specs=[
                pl.BlockSpec((tile_rows, _LANES), in_map),
                pl.BlockSpec((tile_rows, _LANES), in_map),
            ],
            out_specs=pl.BlockSpec(
                (1, 3, _SUBLANES, _LANES), lambda p, i: (p, 0, 0, 0)
            ),
        ),
        compiler_params=pltpu.CompilerParams(
            # TODO(synk): verify in xprof that the leading axis really shards
            # across both TensorCores on v7x; if not, switch to pltpu.CORE_PARALLEL.
            dimension_semantics=("parallel", "arbitrary"),
            vmem_limit_bytes=_VMEM_LIMIT_BYTES,
        ),
    )(out2d, y2d)

    # One tiny cross-lane/cross-sublane reduction over the per-core partials.
    sums = jnp.sum(partials, axis=(0, 2, 3))          # (3,)
    bce_mean = -sums[0] / n_elem                      # negation folded out of kernel
    dice_val = (2.0 * sums[1] + smooth) / (sums[2] + smooth)
    return bce_mean + alpha * dice_val


def _reference(out, y, alpha=1.0):
    o = out.reshape(-1).astype(jnp.float32)
    t = y.reshape(-1).astype(jnp.float32)
    log_o = jnp.maximum(jnp.log(o), -100.0)
    log_1mo = jnp.maximum(jnp.log(1.0 - o), -100.0)
    bce = jnp.mean(-(t * log_o + (1.0 - t) * log_1mo))
    smooth = 1e-09
    inter = jnp.sum(o * t)
    dice_val = (2.0 * inter + smooth) / (jnp.sum(o) + jnp.sum(t) + smooth)
    return bce + alpha * dice_val


if __name__ == "__main__":
    key = jax.random.PRNGKey(0)
    # Primary NCHW shape plus two small shapes that exercise the other code
    # paths: exact tiling (rows divisible by 64) and n % 128 != 0 (pad path).
    shapes = [(2, 4, 16, 16), (2, 4, 32, 32), (2, 3, 17, 16)]
    for shape in shapes:
        key, k1, k2 = jax.random.split(key, 3)
        # `out` must be probabilities in (0, 1) for BCELoss; `y` are {0,1} targets.
        out = jax.nn.sigmoid(jax.random.normal(k1, shape, dtype=jnp.float32))
        y = (jax.random.uniform(k2, shape) > 0.5).astype(jnp.float32)

        loss = jax.block_until_ready(bce_with_dice_loss(out, y, alpha=1.0))
        ref = jax.block_until_ready(_reference(out, y, alpha=1.0))

        assert jnp.isfinite(loss), ("non-finite loss", shape, loss)
        assert jnp.allclose(loss, ref, rtol=1e-5, atol=1e-5), (shape, loss, ref)

    print("KERNEL_OK")
</pallas_src>

<mosaic_0001>
module attributes {stable_mosaic.version = 11 : i64} {
  func.func @kernel(%arg0: i32, %arg1: i32, %arg2: memref<64x128xf32, #tpu.memory_space<vmem>>, %arg3: memref<64x128xf32, #tpu.memory_space<vmem>>, %arg4: memref<1x3x8x128xf32, #tpu.memory_space<vmem>>) attributes {dimension_semantics = [#tpu.dimension_semantics<parallel>, #tpu.dimension_semantics<arbitrary>], iteration_bounds = array<i64: 1, 1>, scalar_prefetch = 0 : i64, scratch_operands = 0 : i64, tpu.core_type = #tpu.core_type<tc>, window_params = [{transform_indices = @transform_0, window_bounds = array<i64: 64, 128>}, {transform_indices = @transform_1, window_bounds = array<i64: 64, 128>}, {transform_indices = @transform_2, window_bounds = array<i64: 1, 3, 8, 128>}]} {
    %c0_i32 = arith.constant 0 : i32
    %0 = arith.cmpi eq, %arg1, %c0_i32 : i32
    %1 = arith.extui %0 : i1 to i32
    %c0_i32_0 = arith.constant 0 : i32
    %2 = arith.cmpi ne, %1, %c0_i32_0 : i32
    scf.if %2 {
      %cst_36 = arith.constant 0.000000e+00 : f32
      %56 = vector.broadcast %cst_36 : f32 to vector<1x3x8x128xf32>
      %c0_37 = arith.constant 0 : index
      %c0_38 = arith.constant 0 : index
      %c0_39 = arith.constant 0 : index
      %c0_40 = arith.constant 0 : index
      %57 = vector.load %arg4[%c0_37, %c0_38, %c0_39, %c0_40] : memref<1x3x8x128xf32, #tpu.memory_space<vmem>>, vector<1x3x8x128xf32>
      tpu.vector_store %arg4[%c0_37, %c0_38, %c0_39, %c0_40], %56 {strides = array<i32>} : memref<1x3x8x128xf32, #tpu.memory_space<vmem>>, vector<1x3x8x128xf32>,
    } else {
    }
    %c0 = arith.constant 0 : index
    %c0_1 = arith.constant 0 : index
    %3 = vector.load %arg2[%c0, %c0_1] : memref<64x128xf32, #tpu.memory_space<vmem>>, vector<64x128xf32>
    %c0_2 = arith.constant 0 : index
    %c0_3 = arith.constant 0 : index
    %4 = vector.load %arg3[%c0_2, %c0_3] : memref<64x128xf32, #tpu.memory_space<vmem>>, vector<64x128xf32>
    %c1_i32 = arith.constant 1 : i32
    %5 = arith.muli %arg0, %c1_i32 : i32
    %6 = arith.addi %5, %arg1 : i32
    %c64_i32 = arith.constant 64 : i32
    %7 = arith.muli %6, %c64_i32 : i32
    %8 = tpu.iota {dimensions = array<i32: 0>} : vector<64x128xi32>
    %c16_i32 = arith.constant 16 : i32
    %9 = arith.subi %c16_i32, %7 : i32
    %10 = vector.broadcast %9 : i32 to vector<64x128xi32>
    %11 = arith.cmpi slt, %8, %10 : vector<64x128xi32>
    %cst = arith.constant 0.000000e+00 : f32
    %12 = vector.broadcast %cst : f32 to vector<64x128xf32>
    %13 = arith.select %11, %3, %12 : vector<64x128xi1>, vector<64x128xf32>
    %cst_4 = arith.constant 0.000000e+00 : f32
    %14 = vector.broadcast %cst_4 : f32 to vector<64x128xf32>
    %15 = arith.select %11, %4, %14 : vector<64x128xi1>, vector<64x128xf32>
    %16 = math.log %13 : vector<64x128xf32>
    %cst_5 = arith.constant -1.000000e+02 : f32
    %17 = vector.broadcast %cst_5 : f32 to vector<64x128xf32>
    %18 = arith.maximumf %16, %17 : vector<64x128xf32>
    %cst_6 = arith.constant 1.000000e+00 : f32
    %19 = vector.broadcast %cst_6 : f32 to vector<64x128xf32>
    %20 = arith.subf %19, %13 : vector<64x128xf32>
    %21 = math.log %20 : vector<64x128xf32>
    %cst_7 = arith.constant -1.000000e+02 : f32
    %22 = vector.broadcast %cst_7 : f32 to vector<64x128xf32>
    %23 = arith.maximumf %21, %22 : vector<64x128xf32>
    %24 = arith.subf %18, %23 : vector<64x128xf32>
    %25 = arith.mulf %15, %24 : vector<64x128xf32>
    %26 = arith.addf %23, %25 : vector<64x128xf32>
    %c0_8 = arith.constant 0 : index
    %c0_9 = arith.constant 0 : index
    %c0_10 = arith.constant 0 : index
    %c0_11 = arith.constant 0 : index
    %27 = vector.load %arg4[%c0_8, %c0_9, %c0_10, %c0_11] : memref<1x3x8x128xf32, #tpu.memory_space<vmem>>, vector<1x1x8x128xf32>
    %28 = vector.shape_cast %27 : vector<1x1x8x128xf32> to vector<8x128xf32>
    %29 = vector.shape_cast %26 : vector<64x128xf32> to vector<1x8x8x128xf32>
    %cst_12 = arith.constant dense<0.000000e+00> : vector<1x8x128xf32>
    %30 = vector.multi_reduction <add>, %29, %cst_12 [1] : vector<1x8x8x128xf32> to vector<1x8x128xf32>
    %cst_13 = arith.constant dense<0.000000e+00> : vector<8x128xf32>
    %31 = vector.multi_reduction <add>, %30, %cst_13 [0] : vector<1x8x128xf32> to vector<8x128xf32>
    %32 = arith.addf %28, %31 : vector<8x128xf32>
    %c0_14 = arith.constant 0 : index
    %c0_15 = arith.constant 0 : index
    %c0_16 = arith.constant 0 : index
    %c0_17 = arith.constant 0 : index
    %33 = vector.load %arg4[%c0_14, %c0_15, %c0_16, %c0_17] : memref<1x3x8x128xf32, #tpu.memory_space<vmem>>, vector<1x1x8x128xf32>
    %34 = vector.shape_cast %33 : vector<1x1x8x128xf32> to vector<8x128xf32>
    %35 = vector.shape_cast %32 : vector<8x128xf32> to vector<1x1x8x128xf32>
    tpu.vector_store %arg4[%c0_14, %c0_15, %c0_16, %c0_17], %35 {strides = array<i32>} : memref<1x3x8x128xf32, #tpu.memory_space<vmem>>, vector<1x1x8x128xf32>,
    %c0_18 = arith.constant 0 : index
    %c1 = arith.constant 1 : index
    %c0_19 = arith.constant 0 : index
    %c0_20 = arith.constant 0 : index
    %36 = vector.load %arg4[%c0_18, %c1, %c0_19, %c0_20] : memref<1x3x8x128xf32, #tpu.memory_space<vmem>>, vector<1x1x8x128xf32>
    %37 = vector.shape_cast %36 : vector<1x1x8x128xf32> to vector<8x128xf32>
    %38 = arith.mulf %13, %15 : vector<64x128xf32>
    %39 = vector.shape_cast %38 : vector<64x128xf32> to vector<1x8x8x128xf32>
    %cst_21 = arith.constant dense<0.000000e+00> : vector<1x8x128xf32>
    %40 = vector.multi_reduction <add>, %39, %cst_21 [1] : vector<1x8x8x128xf32> to vector<1x8x128xf32>
    %cst_22 = arith.constant dense<0.000000e+00> : vector<8x128xf32>
    %41 = vector.multi_reduction <add>, %40, %cst_22 [0] : vector<1x8x128xf32> to vector<8x128xf32>
    %42 = arith.addf %37, %41 : vector<8x128xf32>
    %c0_23 = arith.constant 0 : index
    %c1_24 = arith.constant 1 : index
    %c0_25 = arith.constant 0 : index
    %c0_26 = arith.constant 0 : index
    %43 = vector.load %arg4[%c0_23, %c1_24, %c0_25, %c0_26] : memref<1x3x8x128xf32, #tpu.memory_space<vmem>>, vector<1x1x8x128xf32>
    %44 = vector.shape_cast %43 : vector<1x1x8x128xf32> to vector<8x128xf32>
    %45 = vector.shape_cast %42 : vector<8x128xf32> to vector<1x1x8x128xf32>
    tpu.vector_store %arg4[%c0_23, %c1_24, %c0_25, %c0_26], %45 {strides = array<i32>} : memref<1x3x8x128xf32, #tpu.memory_space<vmem>>, vector<1x1x8x128xf32>,
    %c0_27 = arith.constant 0 : index
    %c2 = arith.constant 2 : index
    %c0_28 = arith.constant 0 : index
    %c0_29 = arith.constant 0 : index
    %46 = vector.load %arg4[%c0_27, %c2, %c0_28, %c0_29] : memref<1x3x8x128xf32, #tpu.memory_space<vmem>>, vector<1x1x8x128xf32>
    %47 = vector.shape_cast %46 : vector<1x1x8x128xf32> to vector<8x128xf32>
    %48 = arith.addf %13, %15 : vector<64x128xf32>
    %49 = vector.shape_cast %48 : vector<64x128xf32> to vector<1x8x8x128xf32>
    %cst_30 = arith.constant dense<0.000000e+00> : vector<1x8x128xf32>
    %50 = vector.multi_reduction <add>, %49, %cst_30 [1] : vector<1x8x8x128xf32> to vector<1x8x128xf32>
    %cst_31 = arith.constant dense<0.000000e+00> : vector<8x128xf32>
    %51 = vector.multi_reduction <add>, %50, %cst_31 [0] : vector<1x8x128xf32> to vector<8x128xf32>
    %52 = arith.addf %47, %51 : vector<8x128xf32>
    %c0_32 = arith.constant 0 : index
    %c2_33 = arith.constant 2 : index
    %c0_34 = arith.constant 0 : index
    %c0_35 = arith.constant 0 : index
    %53 = vector.load %arg4[%c0_32, %c2_33, %c0_34, %c0_35] : memref<1x3x8x128xf32, #tpu.memory_space<vmem>>, vector<1x1x8x128xf32>
    %54 = vector.shape_cast %53 : vector<1x1x8x128xf32> to vector<8x128xf32>
    %55 = vector.shape_cast %52 : vector<8x128xf32> to vector<1x1x8x128xf32>
    tpu.vector_store %arg4[%c0_32, %c2_33, %c0_34, %c0_35], %55 {strides = array<i32>} : memref<1x3x8x128xf32, #tpu.memory_space<vmem>>, vector<1x1x8x128xf32>,
    return
  }
  func.func @transform_0(%arg0: i32, %arg1: i32) -> (i32, i32) {
    %c1_i32 = arith.constant 1 : i32
    %0 = arith.muli %arg0, %c1_i32 : i32
    %1 = arith.addi %0, %arg1 : i32
    %c0_i32 = arith.constant 0 : i32
    %2 = arith.minsi %1, %c0_i32 : i32
    %c0_i32_0 = arith.constant 0 : i32
    %c0_i32_1 = arith.constant 0 : i32
    return %2, %c0_i32_0 : i32, i32
  }
  func.func @transform_1(%arg0: i32, %arg1: i32) -> (i32, i32) {
    %c1_i32 = arith.constant 1 : i32
    %0 = arith.muli %arg0, %c1_i32 : i32
    %1 = arith.addi %0, %arg1 : i32
    %c0_i32 = arith.constant 0 : i32
    %2 = arith.minsi %1, %c0_i32 : i32
    %c0_i32_0 = arith.constant 0 : i32
    %c0_i32_1 = arith.constant 0 : i32
    return %2, %c0_i32_0 : i32, i32
  }
  func.func @transform_2(%arg0: i32, %arg1: i32) -> (i32, i32, i32, i32) {
    %c0_i32 = arith.constant 0 : i32
    %c0_i32_0 = arith.constant 0 : i32
    %c0_i32_1 = arith.constant 0 : i32
    %c0_i32_2 = arith.constant 0 : i32
    return %arg0, %c0_i32, %c0_i32_0, %c0_i32_1 : i32, i32, i32, i32
  }
}

</mosaic_0001>

<llo_original>
// kernel: tpu_custom_call.1
$region0: #{tpu_custom_call.1}
  #allocation0 [shape = 'u32[]', space=smem, size = 0x4, offset = 0x4, fixed_abs, tag = 'smem constant byte address 0x4 - core index']
  #allocation1 [shape = 'u32[144,128]{1,0:T(1,128)}', space=vmem, size = 0x12000, scoped, tag = 'internal scratch']
  %s0 = inlined_call_operand.hbm [shape: f32[16,128], index: 0, kind: input, shape index: {}]
  %s1 = inlined_call_operand.hbm [shape: f32[16,128], index: 1, kind: input, shape index: {}]
  %s2 = inlined_call_operand.hbm [shape: f32[1,3,8,128], index: 2, kind: output, shape index: {}]
  %s3 = sld [smem:[#allocation0]]
  $region30: #{tpu_custom_call.1} parent=0
    _
  %s5 = ssub.s32 1, %s3
  %s6 = scalar_select 0, %s5, %s3
  $region1: #{tpu_custom_call.1} parent=0
    #allocation2 [shape = 'u8[32768]{0}', space=vmem, size = 0x8000, scoped, tag = 'input window, operand 0, single buffered']
    #allocation3 [shape = 's32[1]{0}', space=sflag, size = 0x4, scoped, tag = 'scoped memory for tpu_custom_call.1']
    #allocation4 [shape = 's32[1]{0}', space=sflag, size = 0x4, scoped, tag = 'scoped memory for tpu_custom_call.1']
    #allocation5 [shape = 'u8[32768]{0}', space=vmem, size = 0x8000, scoped, tag = 'input window, operand 1, single buffered']
    #allocation6 [shape = 's32[1]{0}', space=sflag, size = 0x4, scoped, tag = 'scoped memory for tpu_custom_call.1']
    #allocation7 [shape = 'u8[12288]{0}', space=vmem, size = 0x3000, scoped, tag = 'output window, operand 0, single buffered']
    %7 = vsyncpa [#allocation3], 0
    %8 = vsyncpa [#allocation6], 0
    %9 = vsyncpa [#allocation4], 0
    // Predicated region
    $region2: #{tpu_custom_call.1} parent=1 // pred_check
      _
    $region3: #{tpu_custom_call.1} parent=1 // pred_check_branch
      %11 = sbr.rel (0) target = $region5
    $region4: #{tpu_custom_call.1} parent=1 // pred_region
      %s12 = sadd.s32 0, 0
      %p13 = scmp.lt.s32.totalorder %s12, 0
      %s14 = scalar_select %p13, %s12, 0
      %s15 = smul.u32 8, %s14
      %s16 = ssub.s32 2, %s15
      %s17 = smul.u32 128, %s16
      %s19 = ssub.s32 1024, %s17
      %20 = vsyncadd [#allocation3], %s19
      %p21 = scmp.ne.s32.totalorder 0, %s17
      %s22 = smul.addr %s15, 128
      %s23 = scalar_lea.hbm %s0, %s22
      %s24 = smul.u32 8, %s16
      %s25 = sshll.u32 [#allocation2], 4
      %s26 = int_to_ptr.vmem [resolvable:$true] %s25
      %s27 = sshll.u32 %s24, 4
      %31 = dma.hbm_to_vmem [thread:$0]  (%p21), %s23, %s27, %s26, [#allocation3], 128, 128, 8
    $region5: #{tpu_custom_call.1} parent=1 // pred_fallthru
      _
    // Predicated region
    $region6: #{tpu_custom_call.1} parent=1 // pred_check
      _
    $region7: #{tpu_custom_call.1} parent=1 // pred_check_branch
      %33 = sbr.rel (0) target = $region9
    $region8: #{tpu_custom_call.1} parent=1 // pred_region
      %s34 = sadd.s32 0, 0
      %p35 = scmp.lt.s32.totalorder %s34, 0
      %s36 = scalar_select %p35, %s34, 0
      %s37 = smul.u32 8, %s36
      %s38 = ssub.s32 2, %s37
      %s39 = smul.u32 128, %s38
      %s41 = ssub.s32 1024, %s39
      %42 = vsyncadd [#allocation6], %s41
      %p43 = scmp.ne.s32.totalorder 0, %s39
      %s44 = smul.addr %s37, 128
      %s45 = scalar_lea.hbm %s1, %s44
      %s46 = smul.u32 8, %s38
      %s47 = sshll.u32 [#allocation5], 4
      %s48 = int_to_ptr.vmem [resolvable:$true] %s47
      %s49 = sshll.u32 %s46, 4
      %53 = dma.hbm_to_vmem [thread:$0]  (%p43), %s45, %s49, %s48, [#allocation6], 128, 128, 8
    $region9: #{tpu_custom_call.1} parent=1 // pred_fallthru
      _
    // Predicated region
    $region10: #{tpu_custom_call.1} parent=1 // pred_check
      _
    $region11: #{tpu_custom_call.1} parent=1 // pred_check_branch
      %55 = sbr.rel (0) target = $region13
    $region12: #{tpu_custom_call.1} parent=1 // pred_region
      %56 = dma.done [#allocation3], 1024
    $region13: #{tpu_custom_call.1} parent=1 // pred_fallthru
      _
    // Predicated region
    $region14: #{tpu_custom_call.1} parent=1 // pred_check
      _
    $region15: #{tpu_custom_call.1} parent=1 // pred_check_branch
      %58 = sbr.rel (0) target = $region17
    $region16: #{tpu_custom_call.1} parent=1 // pred_region
      %59 = dma.done [#allocation6], 1024
    $region17: #{tpu_custom_call.1} parent=1 // pred_fallthru
      _
    %s60 = sadd.s32 0, 0
    %p61 = scmp.lt.s32.totalorder %s60, 0
    %s62 = scalar_select %p61, %s60, 0
    %s63 = smul.u32 8, %s62
    %s64 = ssub.s32 2, %s63
    %s65 = smul.u32 128, %s64
    %s66 = sadd.s32 0, 0
    %p67 = scmp.lt.s32.totalorder %s66, 0
    %s68 = scalar_select %p67, %s66, 0
    %s69 = smul.u32 8, %s68
    %s70 = ssub.s32 2, %s69
    %s71 = smul.u32 128, %s70
    %p72 = scmp.eq.s32.totalorder 0, 0
    // Predicated region
    $region18: #{tpu_custom_call.1} parent=1 // pred_check
      %p73 = pneg %p72
    $region19: #{tpu_custom_call.1} parent=1 // pred_check_branch
      %75 = sbr.rel (%p73) target = $region21
    $region20: #{tpu_custom_call.1} parent=1 // pred_region
      %76 = vst [vmem:[#allocation7] sm:$0xff] 0.0
      %77 = vst [vmem:[#allocation7 + $0x8] sm:$0xff] 0.0
      %78 = vst [vmem:[#allocation7 + $0x10] sm:$0xff] 0.0
    $region21: #{tpu_custom_call.1} parent=1 // pred_fallthru
      _
    %v79 = vld [vmem:[#allocation2] sm:$0xff]
    %v80 = vld [vmem:[#allocation2 + $0x8] sm:$0xff]
    %v81 = vld [vmem:[#allocation2 + $0x10] sm:$0xff]
    %v82 = vld [vmem:[#allocation2 + $0x18] sm:$0xff]
    %v83 = vld [vmem:[#allocation2 + $0x20] sm:$0xff]
    %v84 = vld [vmem:[#allocation2 + $0x28] sm:$0xff]
    %v85 = vld [vmem:[#allocation2 + $0x30] sm:$0xff]
    %v86 = vld [vmem:[#allocation2 + $0x38] sm:$0xff]
    %v87 = vld [vmem:[#allocation5] sm:$0xff]
    %v88 = vld [vmem:[#allocation5 + $0x8] sm:$0xff]
    %v89 = vld [vmem:[#allocation5 + $0x10] sm:$0xff]
    %v90 = vld [vmem:[#allocation5 + $0x18] sm:$0xff]
    %v91 = vld [vmem:[#allocation5 + $0x20] sm:$0xff]
    %v92 = vld [vmem:[#allocation5 + $0x28] sm:$0xff]
    %v93 = vld [vmem:[#allocation5 + $0x30] sm:$0xff]
    %v94 = vld [vmem:[#allocation5 + $0x38] sm:$0xff]
    %s95 = sadd.s32 0, 0
    %s96 = smul.u32 %s95, 64
    %v97 = vlaneseq
    %v98 = vshrl.u32 %v97, 7
    %v99 = vadd.s32 %v98, 8
    %v100 = vadd.s32 %v98, 16
    %v101 = vadd.s32 %v98, 24
    %v102 = vadd.s32 %v98, 32
    %v103 = vadd.s32 %v98, 40
    %v104 = vadd.s32 %v98, 48
    %v105 = vadd.s32 %v98, 56
    %s106 = ssub.s32 16, %s96
    %v107 = vstv %s106
    %vm108 = vcmp.lt.s32.totalorder %v98, %v107
    %vm109 = vcmp.lt.s32.totalorder %v99, %v107
    %vm110 = vcmp.lt.s32.totalorder %v100, %v107
    %vm111 = vcmp.lt.s32.totalorder %v101, %v107
    %vm112 = vcmp.lt.s32.totalorder %v102, %v107
    %vm113 = vcmp.lt.s32.totalorder %v103, %v107
    %vm114 = vcmp.lt.s32.totalorder %v104, %v107
    %vm115 = vcmp.lt.s32.totalorder %v105, %v107
    %v116 = vsel %vm108, %v79, 0.0
    %v117 = vsel %vm109, %v80, 0.0
    %v118 = vsel %vm110, %v81, 0.0
    %v119 = vsel %vm111, %v82, 0.0
    %v120 = vsel %vm112, %v83, 0.0
    %v121 = vsel %vm113, %v84, 0.0
    %v122 = vsel %vm114, %v85, 0.0
    %v123 = vsel %vm115, %v86, 0.0
    %v124 = vsel %vm108, %v87, 0.0
    %v125 = vsel %vm109, %v88, 0.0
    %v126 = vsel %vm110, %v89, 0.0
    %v127 = vsel %vm111, %v90, 0.0
    %v128 = vsel %vm112, %v91, 0.0
    %v129 = vsel %vm113, %v92, 0.0
    %v130 = vsel %vm114, %v93, 0.0
    %v131 = vsel %vm115, %v94, 0.0
    %v132 = vlog2.pop %v116
    %v133 = vmul.f32 %v132, 0.6931472
    %v134 = vlog2.pop %v117
    %v135 = vmul.f32 %v134, 0.6931472
    %v136 = vlog2.pop %v118
    %v137 = vmul.f32 %v136, 0.6931472
    %v138 = vlog2.pop %v119
    %v139 = vmul.f32 %v138, 0.6931472
    %v140 = vlog2.pop %v120
    %v141 = vmul.f32 %v140, 0.6931472
    %v142 = vlog2.pop %v121
    %v143 = vmul.f32 %v142, 0.6931472
    %v144 = vlog2.pop %v122
    %v145 = vmul.f32 %v144, 0.6931472
    %v146 = vlog2.pop %v123
    %v147 = vmul.f32 %v146, 0.6931472
    %v148 = vmax.f32 %v133, -100.0
    %v149 = vmax.f32 %v135, -100.0
    %v150 = vmax.f32 %v137, -100.0
    %v151 = vmax.f32 %v139, -100.0
    %v152 = vmax.f32 %v141, -100.0
    %v153 = vmax.f32 %v143, -100.0
    %v154 = vmax.f32 %v145, -100.0
    %v155 = vmax.f32 %v147, -100.0
    %v156 = vsub.f32 1.0, %v116
    %v157 = vsub.f32 1.0, %v117
    %v158 = vsub.f32 1.0, %v118
    %v159 = vsub.f32 1.0, %v119
    %v160 = vsub.f32 1.0, %v120
    %v161 = vsub.f32 1.0, %v121
    %v162 = vsub.f32 1.0, %v122
    %v163 = vsub.f32 1.0, %v123
    %v164 = vlog2.pop %v156
    %v165 = vmul.f32 %v164, 0.6931472
    %v166 = vlog2.pop %v157
    %v167 = vmul.f32 %v166, 0.6931472
    %v168 = vlog2.pop %v158
    %v169 = vmul.f32 %v168, 0.6931472
    %v170 = vlog2.pop %v159
    %v171 = vmul.f32 %v170, 0.6931472
    %v172 = vlog2.pop %v160
    %v173 = vmul.f32 %v172, 0.6931472
    %v174 = vlog2.pop %v161
    %v175 = vmul.f32 %v174, 0.6931472
    %v176 = vlog2.pop %v162
    %v177 = vmul.f32 %v176, 0.6931472
    %v178 = vlog2.pop %v163
    %v179 = vmul.f32 %v178, 0.6931472
    %v180 = vmax.f32 %v165, -100.0
    %v181 = vmax.f32 %v167, -100.0
    %v182 = vmax.f32 %v169, -100.0
    %v183 = vmax.f32 %v171, -100.0
    %v184 = vmax.f32 %v173, -100.0
    %v185 = vmax.f32 %v175, -100.0
    %v186 = vmax.f32 %v177, -100.0
    %v187 = vmax.f32 %v179, -100.0
    %v188 = vsub.f32 %v148, %v180
    %v189 = vsub.f32 %v149, %v181
    %v190 = vsub.f32 %v150, %v182
    %v191 = vsub.f32 %v151, %v183
    %v192 = vsub.f32 %v152, %v184
    %v193 = vsub.f32 %v153, %v185
    %v194 = vsub.f32 %v154, %v186
    %v195 = vsub.f32 %v155, %v187
    %v196 = vmul.f32 %v124, %v188
    %v197 = vmul.f32 %v125, %v189
    %v198 = vmul.f32 %v126, %v190
    %v199 = vmul.f32 %v127, %v191
    %v200 = vmul.f32 %v128, %v192
    %v201 = vmul.f32 %v129, %v193
    %v202 = vmul.f32 %v130, %v194
    %v203 = vmul.f32 %v131, %v195
    %v204 = vadd.f32 %v180, %v196
    %v205 = vadd.f32 %v181, %v197
    %v206 = vadd.f32 %v182, %v198
    %v207 = vadd.f32 %v183, %v199
    %v208 = vadd.f32 %v184, %v200
    %v209 = vadd.f32 %v185, %v201
    %v210 = vadd.f32 %v186, %v202
    %v211 = vadd.f32 %v187, %v203
    %v212 = vld [vmem:[#allocation7] sm:$0xff]
    %v213 = vadd.f32 %v204, %v205
    %v214 = vadd.f32 %v213, %v206
    %v215 = vadd.f32 %v214, %v207
    %v216 = vadd.f32 %v215, %v208
    %v217 = vadd.f32 %v216, %v209
    %v218 = vadd.f32 %v217, %v210
    %v219 = vadd.f32 %v218, %v211
    %v220 = vadd.f32 %v219, 0.0
    %v221 = vadd.f32 %v212, %v220
    %222 = vst [vmem:[#allocation7] sm:$0xff] %v221
    %s223 = scalar_lea.vmem [#allocation7], 8
    %v224 = vld [vmem:[%s223] sm:$0xff]
    %v225 = vmul.f32 %v116, %v124
    %v226 = vmul.f32 %v117, %v125
    %v227 = vmul.f32 %v118, %v126
    %v228 = vmul.f32 %v119, %v127
    %v229 = vmul.f32 %v120, %v128
    %v230 = vmul.f32 %v121, %v129
    %v231 = vmul.f32 %v122, %v130
    %v232 = vmul.f32 %v123, %v131
    %v233 = vadd.f32 %v225, %v226
    %v234 = vadd.f32 %v233, %v227
    %v235 = vadd.f32 %v234, %v228
    %v236 = vadd.f32 %v235, %v229
    %v237 = vadd.f32 %v236, %v230
    %v238 = vadd.f32 %v237, %v231
    %v239 = vadd.f32 %v238, %v232
    %v240 = vadd.f32 %v239, 0.0
    %v241 = vadd.f32 %v224, %v240
    %242 = vst [vmem:[%s223] sm:$0xff] %v241
    %s243 = scalar_lea.vmem [#allocation7], 16
    %v244 = vld [vmem:[%s243] sm:$0xff]
    %v245 = vadd.f32 %v116, %v124
    %v246 = vadd.f32 %v117, %v125
    %v247 = vadd.f32 %v118, %v126
    %v248 = vadd.f32 %v119, %v127
    %v249 = vadd.f32 %v120, %v128
    %v250 = vadd.f32 %v121, %v129
    %v251 = vadd.f32 %v122, %v130
    %v252 = vadd.f32 %v123, %v131
    %v253 = vadd.f32 %v245, %v246
    %v254 = vadd.f32 %v253, %v247
    %v255 = vadd.f32 %v254, %v248
    %v256 = vadd.f32 %v255, %v249
    %v257 = vadd.f32 %v256, %v250
    %v258 = vadd.f32 %v257, %v251
    %v259 = vadd.f32 %v258, %v252
    %v260 = vadd.f32 %v259, 0.0
    %v261 = vadd.f32 %v244, %v260
    %262 = vst [vmem:[%s243] sm:$0xff] %v261
    // Predicated region
    $region22: #{tpu_custom_call.1} parent=1 // pred_check
      _
    $region23: #{tpu_custom_call.1} parent=1 // pred_check_branch
      %264 = sbr.rel (0) target = $region25
    $region24: #{tpu_custom_call.1} parent=1 // pred_region
      %s266 = ssub.s32 384, 384
      %267 = vsyncadd [#allocation4], %s266
      %s268 = sshll.u32 [#allocation7], 4
      %s269 = int_to_ptr.vmem [resolvable:$true] %s268
      %274 = dma.vmem_to_hbm [thread:$0]  %s269, 384, %s2, [#allocation4], 128, 128, 8
    $region25: #{tpu_custom_call.1} parent=1 // pred_fallthru
      _
    // Predicated region
    $region26: #{tpu_custom_call.1} parent=1 // pred_check
      _
    $region27: #{tpu_custom_call.1} parent=1 // pred_check_branch
      %276 = sbr.rel (0) target = $region29
    $region28: #{tpu_custom_call.1} parent=1 // pred_region
      %277 = dma.done [#allocation4], 384
    $region29: #{tpu_custom_call.1} parent=1 // pred_fallthru
      _
    %278 = vsyncpa [#allocation3], 1
    %279 = vsyncpa [#allocation6], 1
    %280 = vsyncpa [#allocation4], 1

</llo_original>
